<compile_context>
chip_gen: v7x
topology: tpu7x:2x2x1
jax: 0.10.0
libtpu: 0.0.40
codegen_flags: <defaults>
</compile_context>

<pallas_src>
import functools

import jax
import jax.numpy as jnp
from jax.experimental import pallas as pl
from jax.experimental.pallas import tpu as pltpu


def _channel_attention_kernel(x_ref, w1_ref, w2_ref, o_ref, sum_acc, max_acc,
                              *, inv_hw):
    """Grid: (B, n_spatial_tiles); spatial tiles (last axis) are the reduction.

    x_ref:   (1, C, T)   current spatial tile of one batch row (native dtype)
    w1_ref:  (Cr, C)     fc1 weight (PyTorch layout), VMEM-resident
    w2_ref:  (C, Cr)     fc2 weight (PyTorch layout), VMEM-resident
    o_ref:   (1, 1, C)   sigmoid(channel attention) for this batch row
    sum_acc: (1, C) f32  running spatial sum (-> mean at finalize)
    max_acc: (1, C) f32  running spatial max
    """
    t = pl.program_id(1)

    @pl.when(t == 0)
    def _init():
        sum_acc[...] = jnp.zeros_like(sum_acc)
        max_acc[...] = jnp.full_like(max_acc, -jnp.inf)

    # Steady-state loop body: DMA + reduce only (no f32 materialization of x).
    x = x_ref[...]                                               # (1, C, T)
    sum_acc[...] += jnp.sum(x, axis=-1, dtype=jnp.float32)       # f32 accumulate
    max_acc[...] = jnp.maximum(max_acc[...],
                               jnp.max(x, axis=-1).astype(jnp.float32))

    @pl.when(t == pl.num_programs(1) - 1)
    def _finalize():
        avg_pool = sum_acc[...] * inv_hw                         # (1, C)
        max_pool = max_acc[...]                                  # (1, C)

        w1 = w1_ref[...].astype(jnp.float32)                     # (Cr, C)
        w2 = w2_ref[...].astype(jnp.float32)                     # (C, Cr)

        # Shared MLP, fused: one fc1 dot on stacked pools, one fc2 dot on the
        # ReLU-sum (exact because ReLU precedes the add in the reference).
        pools = jnp.concatenate([avg_pool, max_pool], axis=0)    # (2, C)
        h = jax.lax.dot_general(pools, w1, (((1,), (1,)), ((), ())),
                                preferred_element_type=jnp.float32)   # (2, Cr)
        h = jnp.maximum(h, 0.0)
        h = jnp.sum(h, axis=0, keepdims=True)                    # (1, Cr)
        out = jax.lax.dot_general(h, w2, (((1,), (1,)), ((), ())),
                                  preferred_element_type=jnp.float32)  # (1, C)
        o_ref[...] = jax.nn.sigmoid(out)[:, None, :].astype(o_ref.dtype)


def _pick_spatial_tile(hw, row_bytes, budget_bytes):
    """Largest multiple-of-128 divisor of hw whose (1, C, T) tile fits budget."""
    if hw % 128 != 0:
        return hw                              # full lane extent is always legal
    max_t = max(128, (budget_bytes // max(row_bytes, 1)) // 128 * 128)
    t = min(hw, max_t)
    while hw % t != 0:                         # terminates at 128 (divides hw)
        t -= 128
    return t


def channel_attention(x, fc1_w, fc2_w, *, spatial_tile=None,
                      tile_budget_bytes=8 * 1024 * 1024):
    """x: (B, C, H, W) NCHW.  fc1_w: (C//r, C), fc2_w: (C, C//r) (PyTorch layout)."""
    B, C, H, W = x.shape
    HW = H * W
    x_flat = x.reshape(B, C, HW)

    if spatial_tile is None:
        spatial_tile = _pick_spatial_tile(HW, C * x.dtype.itemsize,
                                          tile_budget_bytes)
    assert HW % spatial_tile == 0, (HW, spatial_tile)
    n_t = HW // spatial_tile

    kernel = functools.partial(_channel_attention_kernel,
                               inv_hw=1.0 / float(HW))

    out = pl.pallas_call(
        kernel,
        out_shape=jax.ShapeDtypeStruct((B, 1, C), x.dtype),
        grid=(B, n_t),
        in_specs=[
            # Streamed input: auto-pipelined (double-buffered) spatial tiles.
            pl.BlockSpec((1, C, spatial_tile), lambda b, t: (b, 0, t)),
            # Tiny fc weights: whole-array, VMEM-resident for the entire grid.
            pl.BlockSpec(memory_space=pltpu.MemorySpace.VMEM),
            pl.BlockSpec(memory_space=pltpu.MemorySpace.VMEM),
        ],
        out_specs=pl.BlockSpec((1, 1, C), lambda b, t: (b, 0, 0)),
        scratch_shapes=[
            pltpu.VMEM((1, C), jnp.float32),   # running sum
            pltpu.VMEM((1, C), jnp.float32),   # running max
        ],
        compiler_params=pltpu.CompilerParams(
            dimension_semantics=("parallel", "arbitrary"),
            vmem_limit_bytes=48 * 1024 * 1024,
        ),
    )(x_flat, fc1_w, fc2_w)

    return out.reshape(B, C, 1, 1)


def channel_attention_ref(x, fc1_w, fc2_w):
    """Pure-JAX reference matching the PyTorch forward exactly."""
    B, C, H, W = x.shape
    avg_pool = jnp.mean(x, axis=(2, 3))
    max_pool = jnp.max(x, axis=(2, 3))
    avg_out = jnp.maximum(avg_pool @ fc1_w.T, 0.0) @ fc2_w.T
    max_out = jnp.maximum(max_pool @ fc1_w.T, 0.0) @ fc2_w.T
    return jax.nn.sigmoid(avg_out + max_out).reshape(B, C, 1, 1)


if __name__ == "__main__":
    B, C, H, W = 2, 32, 16, 16
    reduction = 4
    Cr = C // reduction  # 8

    key = jax.random.PRNGKey(0)
    kx, k1, k2 = jax.random.split(key, 3)

    x = jax.random.normal(kx, (B, C, H, W), dtype=jnp.float32)
    # nn.Linear weight shapes: fc1 -> (C//r, C), fc2 -> (C, C//r)
    fc1_w = jax.random.normal(k1, (Cr, C), dtype=jnp.float32) * 0.1
    fc2_w = jax.random.normal(k2, (C, Cr), dtype=jnp.float32) * 0.1

    # spatial_tile=128 -> 2 reduction steps over H*W=256, exercising the
    # cross-step accumulate path in addition to the auto-pipeline.
    out = channel_attention(x, fc1_w, fc2_w, spatial_tile=128)
    out = jax.block_until_ready(out)

    ref = channel_attention_ref(x, fc1_w, fc2_w)
    assert out.shape == (B, C, 1, 1), out.shape
    assert jnp.allclose(out, ref, atol=1e-5, rtol=1e-5), "mismatch vs reference"

    print("KERNEL_OK")
</pallas_src>

<mosaic_0001>
module attributes {stable_mosaic.version = 11 : i64} {
  func.func @_channel_attention_kernel(%arg0: i32, %arg1: i32, %arg2: memref<1x32x128xf32, #tpu.memory_space<vmem>>, %arg3: memref<8x32xf32, #tpu.memory_space<vmem>>, %arg4: memref<32x8xf32, #tpu.memory_space<vmem>>, %arg5: memref<1x1x32xf32, #tpu.memory_space<vmem>>, %arg6: memref<1x32xf32, #tpu.memory_space<vmem>>, %arg7: memref<1x32xf32, #tpu.memory_space<vmem>>) attributes {dimension_semantics = [#tpu.dimension_semantics<parallel>, #tpu.dimension_semantics<arbitrary>], iteration_bounds = array<i64: 2, 2>, scalar_prefetch = 0 : i64, scratch_operands = 2 : i64, tpu.core_type = #tpu.core_type<tc>, window_params = [{transform_indices = @transform_0, window_bounds = array<i64: 1, 32, 128>}, {pipeline_mode = #tpu.pipeline_mode<synchronous>, transform_indices = @transform_1, window_bounds = array<i64: 8, 32>}, {pipeline_mode = #tpu.pipeline_mode<synchronous>, transform_indices = @transform_2, window_bounds = array<i64: 32, 8>}, {transform_indices = @transform_3, window_bounds = array<i64: 1, 1, 32>}]} {
    %c0_i32 = arith.constant 0 : i32
    %0 = arith.cmpi eq, %arg1, %c0_i32 : i32
    %1 = arith.extui %0 : i1 to i32
    %c0_i32_0 = arith.constant 0 : i32
    %2 = arith.cmpi ne, %1, %c0_i32_0 : i32
    scf.if %2 {
      %cst_13 = arith.constant 0.000000e+00 : f32
      %15 = vector.broadcast %cst_13 : f32 to vector<1x32xf32>
      %c0_14 = arith.constant 0 : index
      %c0_15 = arith.constant 0 : index
      %16 = vector.load %arg6[%c0_14, %c0_15] : memref<1x32xf32, #tpu.memory_space<vmem>>, vector<1x32xf32>
      tpu.vector_store %arg6[%c0_14, %c0_15], %15 {strides = array<i32>} : memref<1x32xf32, #tpu.memory_space<vmem>>, vector<1x32xf32>,
      %cst_16 = arith.constant 0xFF800000 : f32
      %17 = vector.broadcast %cst_16 : f32 to vector<1x32xf32>
      %c0_17 = arith.constant 0 : index
      %c0_18 = arith.constant 0 : index
      %18 = vector.load %arg7[%c0_17, %c0_18] : memref<1x32xf32, #tpu.memory_space<vmem>>, vector<1x32xf32>
      tpu.vector_store %arg7[%c0_17, %c0_18], %17 {strides = array<i32>} : memref<1x32xf32, #tpu.memory_space<vmem>>, vector<1x32xf32>,
    } else {
    }
    %c0 = arith.constant 0 : index
    %c0_1 = arith.constant 0 : index
    %c0_2 = arith.constant 0 : index
    %3 = vector.load %arg2[%c0, %c0_1, %c0_2] : memref<1x32x128xf32, #tpu.memory_space<vmem>>, vector<1x32x128xf32>
    %c0_3 = arith.constant 0 : index
    %c0_4 = arith.constant 0 : index
    %4 = vector.load %arg6[%c0_3, %c0_4] : memref<1x32xf32, #tpu.memory_space<vmem>>, vector<1x32xf32>
    %cst = arith.constant dense<0.000000e+00> : vector<1x32xf32>
    %5 = vector.multi_reduction <add>, %3, %cst [2] : vector<1x32x128xf32> to vector<1x32xf32>
    %6 = arith.addf %4, %5 : vector<1x32xf32>
    %c0_5 = arith.constant 0 : index
    %c0_6 = arith.constant 0 : index
    %7 = vector.load %arg6[%c0_5, %c0_6] : memref<1x32xf32, #tpu.memory_space<vmem>>, vector<1x32xf32>
    tpu.vector_store %arg6[%c0_5, %c0_6], %6 {strides = array<i32>} : memref<1x32xf32, #tpu.memory_space<vmem>>, vector<1x32xf32>,
    %c0_7 = arith.constant 0 : index
    %c0_8 = arith.constant 0 : index
    %8 = vector.load %arg7[%c0_7, %c0_8] : memref<1x32xf32, #tpu.memory_space<vmem>>, vector<1x32xf32>
    %cst_9 = arith.constant dense<0xFF800000> : vector<1x32xf32>
    %9 = vector.multi_reduction <maximumf>, %3, %cst_9 [2] : vector<1x32x128xf32> to vector<1x32xf32>
    %10 = arith.maximumf %8, %9 : vector<1x32xf32>
    %c0_10 = arith.constant 0 : index
    %c0_11 = arith.constant 0 : index
    %11 = vector.load %arg7[%c0_10, %c0_11] : memref<1x32xf32, #tpu.memory_space<vmem>>, vector<1x32xf32>
    tpu.vector_store %arg7[%c0_10, %c0_11], %10 {strides = array<i32>} : memref<1x32xf32, #tpu.memory_space<vmem>>, vector<1x32xf32>,
    %c1_i32 = arith.constant 1 : i32
    %12 = arith.cmpi eq, %arg1, %c1_i32 : i32
    %13 = arith.extui %12 : i1 to i32
    %c0_i32_12 = arith.constant 0 : i32
    %14 = arith.cmpi ne, %13, %c0_i32_12 : i32
    scf.if %14 {
      %c0_13 = arith.constant 0 : index
      %c0_14 = arith.constant 0 : index
      %15 = vector.load %arg6[%c0_13, %c0_14] : memref<1x32xf32, #tpu.memory_space<vmem>>, vector<1x32xf32>
      %cst_15 = arith.constant 3.906250e-03 : f32
      %16 = vector.broadcast %cst_15 : f32 to vector<1x32xf32>
      %17 = arith.mulf %15, %16 : vector<1x32xf32>
      %c0_16 = arith.constant 0 : index
      %c0_17 = arith.constant 0 : index
      %18 = vector.load %arg7[%c0_16, %c0_17] : memref<1x32xf32, #tpu.memory_space<vmem>>, vector<1x32xf32>
      %c0_18 = arith.constant 0 : index
      %c0_19 = arith.constant 0 : index
      %19 = vector.load %arg3[%c0_18, %c0_19] : memref<8x32xf32, #tpu.memory_space<vmem>>, vector<8x32xf32>
      %c0_20 = arith.constant 0 : index
      %c0_21 = arith.constant 0 : index
      %20 = vector.load %arg4[%c0_20, %c0_21] : memref<32x8xf32, #tpu.memory_space<vmem>>, vector<32x8xf32>
      %21 = tpu.concatenate %17, %18 in 0 : vector<1x32xf32>, vector<1x32xf32> -> vector<2x32xf32>
      %cst_22 = arith.constant dense<0.000000e+00> : vector<2x8xf32>
      %22 = tpu.matmul %21, %19, %cst_22 {dimension_numbers = #tpu.dot_dimension_numbers<[1], [1], [0], [0], [0, 0, 1, 0], [], []>} : vector<2x32xf32>, vector<8x32xf32>, vector<2x8xf32> -> vector<2x8xf32>
      %cst_23 = arith.constant 0.000000e+00 : f32
      %23 = vector.broadcast %cst_23 : f32 to vector<2x8xf32>
      %24 = arith.maximumf %22, %23 : vector<2x8xf32>
      %cst_24 = arith.constant dense<0.000000e+00> : vector<8xf32>
      %25 = vector.multi_reduction <add>, %24, %cst_24 [0] : vector<2x8xf32> to vector<8xf32>
      %26 = vector.shape_cast %25 : vector<8xf32> to vector<1x8xf32>
      %cst_25 = arith.constant dense<0.000000e+00> : vector<1x32xf32>
      %27 = tpu.matmul %26, %20, %cst_25 {dimension_numbers = #tpu.dot_dimension_numbers<[1], [1], [0], [0], [0, 0, 1, 0], [], []>} : vector<1x8xf32>, vector<32x8xf32>, vector<1x32xf32> -> vector<1x32xf32>
      %28 = arith.negf %27 : vector<1x32xf32>
      %29 = math.exp %28 : vector<1x32xf32>
      %cst_26 = arith.constant 1.000000e+00 : f32
      %30 = vector.broadcast %cst_26 : f32 to vector<1x32xf32>
      %31 = arith.addf %30, %29 : vector<1x32xf32>
      %32 = arith.divf %30, %31 : vector<1x32xf32>
      %33 = vector.shape_cast %32 : vector<1x32xf32> to vector<1x1x32xf32>
      %c0_27 = arith.constant 0 : index
      %c0_28 = arith.constant 0 : index
      %c0_29 = arith.constant 0 : index
      %34 = vector.load %arg5[%c0_27, %c0_28, %c0_29] : memref<1x1x32xf32, #tpu.memory_space<vmem>>, vector<1x1x32xf32>
      tpu.vector_store %arg5[%c0_27, %c0_28, %c0_29], %33 {strides = array<i32>} : memref<1x1x32xf32, #tpu.memory_space<vmem>>, vector<1x1x32xf32>,
    } else {
    }
    return
  }
  func.func @transform_0(%arg0: i32, %arg1: i32) -> (i32, i32, i32) {
    %c0_i32 = arith.constant 0 : i32
    %c0_i32_0 = arith.constant 0 : i32
    return %arg0, %c0_i32, %arg1 : i32, i32, i32
  }
  func.func @transform_1(%arg0: i32, %arg1: i32) -> (i32, i32) {
    %c0_i32 = arith.constant 0 : i32
    %c0_i32_0 = arith.constant 0 : i32
    %c0_i32_1 = arith.constant 0 : i32
    return %c0_i32, %c0_i32_0 : i32, i32
  }
  func.func @transform_2(%arg0: i32, %arg1: i32) -> (i32, i32) {
    %c0_i32 = arith.constant 0 : i32
    %c0_i32_0 = arith.constant 0 : i32
    %c0_i32_1 = arith.constant 0 : i32
    return %c0_i32, %c0_i32_0 : i32, i32
  }
  func.func @transform_3(%arg0: i32, %arg1: i32) -> (i32, i32, i32) {
    %c0_i32 = arith.constant 0 : i32
    %c0_i32_0 = arith.constant 0 : i32
    %c0_i32_1 = arith.constant 0 : i32
    return %arg0, %c0_i32, %c0_i32_0 : i32, i32, i32
  }
}

</mosaic_0001>

<llo_original>
// kernel: tpu_custom_call.1
$region0: #{tpu_custom_call.1}
  #allocation0 [shape = 'u32[]', space=smem, size = 0x4, offset = 0x4, fixed_abs, tag = 'smem constant byte address 0x4 - core index']
  #allocation1 [shape = 'u32[144,128]{1,0:T(1,128)}', space=vmem, size = 0x12000, scoped, tag = 'internal scratch']
  #allocation2 [shape = 'f32[1,32]{1,0:T(1,128)}', space=vmem, size = 0x200, scoped, tag = 'scratch operand']
  #allocation3 [shape = 'f32[1,32]{1,0:T(1,128)}', space=vmem, size = 0x200, scoped, tag = 'scratch operand']
  %s0 = inlined_call_operand.hbm [shape: f32[2,32,256], index: 0, kind: input, shape index: {}]
  %s1 = inlined_call_operand.vmem [shape: f32[8,32], index: 1, kind: input, shape index: {}]
  %s2 = inlined_call_operand.vmem [shape: f32[32,8], index: 2, kind: input, shape index: {}]
  %s3 = inlined_call_operand.hbm [shape: f32[2,1,32], index: 3, kind: output, shape index: {}]
  %s4 = sld [smem:[#allocation0]]
  $region57: #{tpu_custom_call.1} parent=0
    _
  %s6 = ssub.s32 1, %s4
  %s7 = scalar_select 0, %s6, %s4
  $region1: #{tpu_custom_call.1} parent=0
    #allocation4 [shape = 'u8[32768]{0}', space=vmem, size = 0x8000, scoped, tag = 'input window, operand 0']
    #allocation5 [shape = 's32[2]{0}', space=sflag, size = 0x8, scoped, tag = 'scoped memory for tpu_custom_call.1']
    #allocation6 [shape = 's32[2]{0}', space=sflag, size = 0x8, scoped, tag = 'scoped memory for tpu_custom_call.1']
    #allocation7 [shape = 'u8[1024]{0}', space=vmem, size = 0x400, scoped, tag = 'output window, operand 0']
    %8 = vsyncpa [#allocation5], 0
    %s9 = scalar_lea.sflag [#allocation5], 1
    %10 = vsyncpa %s9, 0
    %11 = vsyncpa [#allocation6], 0
    %s12 = scalar_lea.sflag [#allocation6], 1
    %13 = vsyncpa %s12, 0
    loop: start=0, step=1, limit=6
    $region2: #{tpu_custom_call.1} parent=1 // loop_pre_header
      _
    $region3: #{tpu_custom_call.1} parent=1 // loop_header
      %s15 = sphi 0, %s19
      %p16 = scmp.ge.s32.totalorder %s15, 6
      %s22 = sphi 0, %s34
      %s23 = sphi 0, %s30
      %s24 = sphi 0, %s22
      %s25 = sphi 0, %s23
      %s26 = sphi 0, %s24
      %s27 = sphi 0, %s25
      %s39 = sphi 0, %s41
      %s42 = sphi 0, %s39
      %s43 = sphi 0, %s42
      %s59 = sphi 0, %s43
      %s63 = sphi 0, %s63
      %s65 = sphi 0, %s63
      %s66 = sphi 0, %s65
      %s80 = sphi 0, %s66
      %s84 = sphi 0, %s84
      %s86 = sphi 0, %s84
      %s87 = sphi 0, %s86
      %s101 = sphi 0, %s87
      %s107 = sphi 0, %s109
      %s110 = sphi 0, %s107
      %s111 = sphi 0, %s110
      %s127 = sphi 0, %s111
    $region4: #{tpu_custom_call.1} parent=1 // loop_header_branch
      %18 = sbr.rel (%p16) target = $region8
    $region5: #{tpu_custom_call.1} parent=1 // loop_body
      %s20 = ssub.s32 %s15, 1
      %s21 = ssub.s32 %s15, 2
      %s28 = sadd.s32 1, %s23
      %p29 = scmp.ge.s32.totalorder %s28, 2
      %s30 = scalar_select %p29, 0, %s28
      %s31 = sadd.s32 1, %s22
      %s32 = scalar_select %p29, %s31, %s22
      %p33 = scmp.ge.s32.totalorder %s32, 2
      %s34 = scalar_select %p33, 0, %s32
      %s35 = ssub.s32 %s22, %s34
      %s36 = ssub.s32 %s23, %s30
      %s37 = sor.u32 %s35, %s36
      %p38 = scmp.eq.s32.totalorder %s37, 0
      %s40 = sadd.s32 %s39, 1
      %s41 = scalar_select %p38, %s39, %s40
      %p44 = pneg %p38
      %p45 = scmp.eq.s32.totalorder %s15, 3
      %p46 = por %p44, %p45
      %p47 = scmp.ne.s32.totalorder %s39, %s42
      %p48 = scmp.eq.s32.totalorder %s15, 0
      %p49 = por %p47, %p48
      %p50 = scmp.ne.s32.totalorder %s39, %s42
      %p51 = scmp.eq.s32.totalorder %s20, 3
      %p52 = por %p50, %p51
      %p53 = scmp.ne.s32.totalorder %s42, %s43
      %p54 = scmp.eq.s32.totalorder %s20, 0
      %p55 = por %p53, %p54
      %p56 = scmp.ne.s32.totalorder %s42, %s43
      %p57 = scmp.eq.s32.totalorder %s21, 3
      %p58 = por %p56, %p57
      %p60 = scmp.ne.s32.totalorder %s43, %s59
      %p61 = scmp.eq.s32.totalorder %s21, 0
      %p62 = por %p60, %p61
      %s64 = sadd.s32 %s63, 1
      %p67 = scmp.eq.s32.totalorder %s15, 3
      %p68 = scmp.ne.s32.totalorder %s63, %s65
      %p69 = scmp.eq.s32.totalorder %s15, 0
      %p70 = por %p68, %p69
      %p71 = scmp.ne.s32.totalorder %s63, %s65
      %p72 = scmp.eq.s32.totalorder %s20, 3
      %p73 = por %p71, %p72
      %p74 = scmp.ne.s32.totalorder %s65, %s66
      %p75 = scmp.eq.s32.totalorder %s20, 0
      %p76 = por %p74, %p75
      %p77 = scmp.ne.s32.totalorder %s65, %s66
      %p78 = scmp.eq.s32.totalorder %s21, 3
      %p79 = por %p77, %p78
      %p81 = scmp.ne.s32.totalorder %s66, %s80
      %p82 = scmp.eq.s32.totalorder %s21, 0
      %p83 = por %p81, %p82
      %s85 = sadd.s32 %s84, 1
      %p88 = scmp.eq.s32.totalorder %s15, 3
      %p89 = scmp.ne.s32.totalorder %s84, %s86
      %p90 = scmp.eq.s32.totalorder %s15, 0
      %p91 = por %p89, %p90
      %p92 = scmp.ne.s32.totalorder %s84, %s86
      %p93 = scmp.eq.s32.totalorder %s20, 3
      %p94 = por %p92, %p93
      %p95 = scmp.ne.s32.totalorder %s86, %s87
      %p96 = scmp.eq.s32.totalorder %s20, 0
      %p97 = por %p95, %p96
      %p98 = scmp.ne.s32.totalorder %s86, %s87
      %p99 = scmp.eq.s32.totalorder %s21, 3
      %p100 = por %p98, %p99
      %p102 = scmp.ne.s32.totalorder %s87, %s101
      %p103 = scmp.eq.s32.totalorder %s21, 0
      %p104 = por %p102, %p103
      %s105 = ssub.s32 %s22, %s34
      %p106 = scmp.eq.s32.totalorder %s105, 0
      %s108 = sadd.s32 %s107, 1
      %s109 = scalar_select %p106, %s107, %s108
      %p112 = pneg %p106
      %p113 = scmp.eq.s32.totalorder %s15, 3
      %p114 = por %p112, %p113
      %p115 = scmp.ne.s32.totalorder %s107, %s110
      %p116 = scmp.eq.s32.totalorder %s15, 0
      %p117 = por %p115, %p116
      %p118 = scmp.ne.s32.totalorder %s107, %s110
      %p119 = scmp.eq.s32.totalorder %s20, 3
      %p120 = por %p118, %p119
      %p121 = scmp.ne.s32.totalorder %s110, %s111
      %p122 = scmp.eq.s32.totalorder %s20, 0
      %p123 = por %p121, %p122
      %p124 = scmp.ne.s32.totalorder %s110, %s111
      %p125 = scmp.eq.s32.totalorder %s21, 3
      %p126 = por %p124, %p125
      %p128 = scmp.ne.s32.totalorder %s111, %s127
      %p129 = scmp.eq.s32.totalorder %s21, 0
      %p130 = por %p128, %p129
      %p131 = scmp.le.s32.totalorder 1, %s15
      %p132 = scmp.lt.s32.totalorder %s15, 5
      %p133 = pnand %p131, %p132
      %p134 = pneg %p133
      // Predicated region
      $region9: #{tpu_custom_call.1} parent=5 // pred_check
        _
      $region10: #{tpu_custom_call.1} parent=5 // pred_check_branch
        %136 = sbr.rel (%p133) target = $region12
      $region11: #{tpu_custom_call.1} parent=5 // pred_region
        %s137 = ssub.s32 %s15, 1
        // Predicated region
        $region13: #{tpu_custom_call.1} parent=11 // pred_check
          %p138 = pneg %p76
        $region14: #{tpu_custom_call.1} parent=11 // pred_check_branch
          %140 = sbr.rel (%p138) target = $region16
        $region15: #{tpu_custom_call.1} parent=11 // pred_region
          _
        $region16: #{tpu_custom_call.1} parent=11 // pred_fallthru
          _
        // Predicated region
        $region17: #{tpu_custom_call.1} parent=11 // pred_check
          %p141 = pneg %p97
        $region18: #{tpu_custom_call.1} parent=11 // pred_check_branch
          %143 = sbr.rel (%p141) target = $region20
        $region19: #{tpu_custom_call.1} parent=11 // pred_region
          _
        $region20: #{tpu_custom_call.1} parent=11 // pred_fallthru
          _
      $region12: #{tpu_custom_call.1} parent=5 // pred_fallthru
        _
      %p144 = scmp.lt.s32.totalorder %s15, 4
      // Predicated region
      $region21: #{tpu_custom_call.1} parent=5 // pred_check
        %p145 = pneg %p144
      $region22: #{tpu_custom_call.1} parent=5 // pred_check_branch
        %147 = sbr.rel (%p145) target = $region24
      $region23: #{tpu_custom_call.1} parent=5 // pred_region
        // Predicated region
        $region25: #{tpu_custom_call.1} parent=23 // pred_check
          %p148 = pneg %p49
        $region26: #{tpu_custom_call.1} parent=23 // pred_check_branch
          %150 = sbr.rel (%p148) target = $region28
        $region27: #{tpu_custom_call.1} parent=23 // pred_region
          %s151 = sand.u32 %s39, 1
          %s152 = scalar_lea.sflag [#allocation5], %s151
          %s153 = sand.u32 %s39, 1
          %s154 = smul.addr %s153, 32
          %s155 = scalar_lea.vmem [#allocation4], %s154
          %s157 = ssub.s32 512, 512
          %158 = vsyncadd %s152, %s157
          %s159 = smul.addr %s22, 8
          %s160 = sadd.s32 %s23, %s159
          %s161 = smul.addr %s160, 128
          %s162 = scalar_lea.hbm %s0, %s161
          %s163 = sshll.u32 %s155, 4
          %s164 = int_to_ptr.vmem [resolvable:$true] %s163
          %169 = dma.hbm_to_vmem [thread:$0]  %s162, 512, %s164, %s152, 256, 128, 8
        $region28: #{tpu_custom_call.1} parent=23 // pred_fallthru
          _
      $region24: #{tpu_custom_call.1} parent=5 // pred_fallthru
        _
      %p170 = scmp.le.s32.totalorder 1, %s15
      %p171 = scmp.lt.s32.totalorder %s15, 5
      %p172 = pnand %p170, %p171
      %p173 = pneg %p172
      // Predicated region
      $region29: #{tpu_custom_call.1} parent=5 // pred_check
        _
      $region30: #{tpu_custom_call.1} parent=5 // pred_check_branch
        %175 = sbr.rel (%p172) target = $region32
      $region31: #{tpu_custom_call.1} parent=5 // pred_region
        %s176 = ssub.s32 %s15, 1
        %s177 = sand.u32 %s42, 1
        %s178 = scalar_lea.sflag [#allocation5], %s177
        %s179 = sand.u32 %s42, 1
        %s180 = smul.addr %s179, 32
        %s181 = scalar_lea.vmem [#allocation4], %s180
        // Predicated region
        $region33: #{tpu_custom_call.1} parent=31 // pred_check
          %p182 = pneg %p55
        $region34: #{tpu_custom_call.1} parent=31 // pred_check_branch
          %184 = sbr.rel (%p182) target = $region36
        $region35: #{tpu_custom_call.1} parent=31 // pred_region
          %185 = dma.done %s178, 512
        $region36: #{tpu_custom_call.1} parent=31 // pred_fallthru
          _
        %s186 = sand.u32 %s42, 1
        %s187 = scalar_lea.sflag [#allocation5], %s186
        %s188 = sand.u32 %s42, 1
        %s189 = smul.addr %s188, 32
        %s190 = scalar_lea.vmem [#allocation4], %s189
        %p191 = pneg %p55
        %p192 = pneg %p52
        %p193 = pneg %p76
        %p194 = pneg %p73
        %p195 = pneg %p97
        %p196 = pneg %p94
        %p197 = pneg %p123
        %p198 = pneg %p120
        %s199 = sand.u32 %s110, 1
        %s200 = scalar_lea.sflag [#allocation6], %s199
        %s201 = sand.u32 %s110, 1
        %s202 = scalar_lea.vmem [#allocation7], %s201
        %p203 = scmp.eq.s32.totalorder %s25, 0
        // Predicated region
        $region37: #{tpu_custom_call.1} parent=31 // pred_check
          %p204 = pneg %p203
        $region38: #{tpu_custom_call.1} parent=31 // pred_check_branch
          %206 = sbr.rel (%p204) target = $region40
        $region39: #{tpu_custom_call.1} parent=31 // pred_region
          %vm207 = vcmask 253952
          %208 = vst.msk [vmem:[#allocation2] sm:$0x1] %vm207, 0.0
          %209 = vst.msk [vmem:[#allocation3] sm:$0x1] %vm207, -inf
        $region40: #{tpu_custom_call.1} parent=31 // pred_fallthru
          _
        %v210 = vld [vmem:[%s181] sm:$0xff]
        %v211 = vld [vmem:[%s181 + $0x8] sm:$0xff]
        %v212 = vld [vmem:[%s181 + $0x10] sm:$0xff]
        %v213 = vld [vmem:[%s181 + $0x18] sm:$0xff]
        %v214 = vld [vmem:[#allocation2] sm:$0x1]
        %215 = vadd.xlane.f32.xlu0 %v210
        %v216 = vpop.xlane.xlu0 %215
        %217 = vadd.xlane.f32.xlu0 %v211
        %v218 = vpop.xlane.xlu0 %217
        %219 = vadd.xlane.f32.xlu0 %v212
        %v220 = vpop.xlane.xlu0 %219
        %221 = vadd.xlane.f32.xlu0 %v213
        %v222 = vpop.xlane.xlu0 %221
        %v227 = vlaneseq
        %v228 = vshrl.u32 %v227, 7
        %v229 = vsub.s32 0, %v228
        %v230 = vrot.slane %v216, %v229
        %v231 = vlaneseq
        %v232 = vshrl.u32 %v231, 7
        %v233 = vsub.s32 1, %v232
        %v234 = vrot.slane %v216, %v233
        %v235 = vlaneseq
        %v236 = vshrl.u32 %v235, 7
        %v237 = vsub.s32 2, %v236
        %v238 = vrot.slane %v216, %v237
        %v239 = vlaneseq
        %v240 = vshrl.u32 %v239, 7
        %v241 = vsub.s32 3, %v240
        %v242 = vrot.slane %v216, %v241
        %v243 = vlaneseq
        %v244 = vshrl.u32 %v243, 7
        %v245 = vsub.s32 4, %v244
        %v246 = vrot.slane %v216, %v245
        %v247 = vlaneseq
        %v248 = vshrl.u32 %v247, 7
        %v249 = vsub.s32 5, %v248
        %v250 = vrot.slane %v216, %v249
        %v251 = vlaneseq
        %v252 = vshrl.u32 %v251, 7
        %v253 = vsub.s32 6, %v252
        %v254 = vrot.slane %v216, %v253
        %v255 = vlaneseq
        %v256 = vshrl.u32 %v255, 7
        %v257 = vsub.s32 7, %v256
        %v258 = vrot.slane %v216, %v257
        %v259 = vlaneseq
        %v260 = vshrl.u32 %v259, 7
        %v261 = vsub.s32 0, %v260
        %v262 = vrot.slane %v218, %v261
        %v263 = vlaneseq
        %v264 = vshrl.u32 %v263, 7
        %v265 = vsub.s32 1, %v264
        %v266 = vrot.slane %v218, %v265
        %v267 = vlaneseq
        %v268 = vshrl.u32 %v267, 7
        %v269 = vsub.s32 2, %v268
        %v270 = vrot.slane %v218, %v269
        %v271 = vlaneseq
        %v272 = vshrl.u32 %v271, 7
        %v273 = vsub.s32 3, %v272
        %v274 = vrot.slane %v218, %v273
        %v275 = vlaneseq
        %v276 = vshrl.u32 %v275, 7
        %v277 = vsub.s32 4, %v276
        %v278 = vrot.slane %v218, %v277
        %v279 = vlaneseq
        %v280 = vshrl.u32 %v279, 7
        %v281 = vsub.s32 5, %v280
        %v282 = vrot.slane %v218, %v281
        %v283 = vlaneseq
        %v284 = vshrl.u32 %v283, 7
        %v285 = vsub.s32 6, %v284
        %v286 = vrot.slane %v218, %v285
        %v287 = vlaneseq
        %v288 = vshrl.u32 %v287, 7
        %v289 = vsub.s32 7, %v288
        %v290 = vrot.slane %v218, %v289
        %v291 = vlaneseq
        %v292 = vshrl.u32 %v291, 7
        %v293 = vsub.s32 0, %v292
        %v294 = vrot.slane %v220, %v293
        %v295 = vlaneseq
        %v296 = vshrl.u32 %v295, 7
        %v297 = vsub.s32 1, %v296
        %v298 = vrot.slane %v220, %v297
        %v299 = vlaneseq
        %v300 = vshrl.u32 %v299, 7
        %v301 = vsub.s32 2, %v300
        %v302 = vrot.slane %v220, %v301
        %v303 = vlaneseq
        %v304 = vshrl.u32 %v303, 7
        %v305 = vsub.s32 3, %v304
        %v306 = vrot.slane %v220, %v305
        %v307 = vlaneseq
        %v308 = vshrl.u32 %v307, 7
        %v309 = vsub.s32 4, %v308
        %v310 = vrot.slane %v220, %v309
        %v311 = vlaneseq
        %v312 = vshrl.u32 %v311, 7
        %v313 = vsub.s32 5, %v312
        %v314 = vrot.slane %v220, %v313
        %v315 = vlaneseq
        %v316 = vshrl.u32 %v315, 7
        %v317 = vsub.s32 6, %v316
        %v318 = vrot.slane %v220, %v317
        %v319 = vlaneseq
        %v320 = vshrl.u32 %v319, 7
        %v321 = vsub.s32 7, %v320
        %v322 = vrot.slane %v220, %v321
        %v323 = vlaneseq
        %v324 = vshrl.u32 %v323, 7
        %v325 = vsub.s32 0, %v324
        %v326 = vrot.slane %v222, %v325
        %v327 = vlaneseq
        %v328 = vshrl.u32 %v327, 7
        %v329 = vsub.s32 1, %v328
        %v330 = vrot.slane %v222, %v329
        %v331 = vlaneseq
        %v332 = vshrl.u32 %v331, 7
        %v333 = vsub.s32 2, %v332
        %v334 = vrot.slane %v222, %v333
        %v335 = vlaneseq
        %v336 = vshrl.u32 %v335, 7
        %v337 = vsub.s32 3, %v336
        %v338 = vrot.slane %v222, %v337
        %v339 = vlaneseq
        %v340 = vshrl.u32 %v339, 7
        %v341 = vsub.s32 4, %v340
        %v342 = vrot.slane %v222, %v341
        %v343 = vlaneseq
        %v344 = vshrl.u32 %v343, 7
        %v345 = vsub.s32 5, %v344
        %v346 = vrot.slane %v222, %v345
        %v347 = vlaneseq
        %v348 = vshrl.u32 %v347, 7
        %v349 = vsub.s32 6, %v348
        %v350 = vrot.slane %v222, %v349
        %v351 = vlaneseq
        %v352 = vshrl.u32 %v351, 7
        %v353 = vsub.s32 7, %v352
        %v354 = vrot.slane %v222, %v353
        %v355 = vcombine.low %v230, %v234
        %v356 = vcombine.low %v238, %v242
        %v357 = vcombine.low %v246, %v250
        %v358 = vcombine.low %v254, %v258
        %v360 = vunpack.c.l.s4 1966171168
        %v361 = vunpack.c.0.s8 %v360
        %v362 = vlaneseq
        %v363 = vshrl.u32 %v362, 7
        %v364 = vsub.s32 %v361, %v363
        %v365 = vrot.slane %v355, %v364
        %v367 = vunpack.c.l.s4 1966171168
        %v368 = vunpack.c.0.s8 %v367
        %v369 = vlaneseq
        %v370 = vshrl.u32 %v369, 7
        %v371 = vsub.s32 %v368, %v370
        %v372 = vrot.slane %v356, %v371
        %v374 = vunpack.c.l.s4 1966171168
        %v375 = vunpack.c.0.s8 %v374
        %v376 = vlaneseq
        %v377 = vshrl.u32 %v376, 7
        %v378 = vsub.s32 %v375, %v377
        %v379 = vrot.slane %v357, %v378
        %v381 = vunpack.c.l.s4 1966171168
        %v382 = vunpack.c.0.s8 %v381
        %v383 = vlaneseq
        %v384 = vshrl.u32 %v383, 7
        %v385 = vsub.s32 %v382, %v384
        %v386 = vrot.slane %v358, %v385
        %v387 = vcombine.low %v365, %v372
        %v388 = vcombine.low %v379, %v386
        %v390 = vunpack.c.l.s4 1966171168
        %v391 = vunpack.c.0.s8 %v390
        %v392 = vlaneseq
        %v393 = vshrl.u32 %v392, 7
        %v394 = vsub.s32 %v391, %v393
        %v395 = vrot.slane %v387, %v394
        %v397 = vunpack.c.l.s4 1966171168
        %v398 = vunpack.c.0.s8 %v397
        %v399 = vlaneseq
        %v400 = vshrl.u32 %v399, 7
        %v401 = vsub.s32 %v398, %v400
        %v402 = vrot.slane %v388, %v401
        %v403 = vcombine.low %v395, %v402
        %v404 = vcombine.low %v262, %v266
        %v405 = vcombine.low %v270, %v274
        %v406 = vcombine.low %v278, %v282
        %v407 = vcombine.low %v286, %v290
        %v409 = vunpack.c.l.s4 1966171168
        %v410 = vunpack.c.0.s8 %v409
        %v411 = vlaneseq
        %v412 = vshrl.u32 %v411, 7
        %v413 = vsub.s32 %v410, %v412
        %v414 = vrot.slane %v404, %v413
        %v416 = vunpack.c.l.s4 1966171168
        %v417 = vunpack.c.0.s8 %v416
        %v418 = vlaneseq
        %v419 = vshrl.u32 %v418, 7
        %v420 = vsub.s32 %v417, %v419
        %v421 = vrot.slane %v405, %v420
        %v423 = vunpack.c.l.s4 1966171168
        %v424 = vunpack.c.0.s8 %v423
        %v425 = vlaneseq
        %v426 = vshrl.u32 %v425, 7
        %v427 = vsub.s32 %v424, %v426
        %v428 = vrot.slane %v406, %v427
        %v430 = vunpack.c.l.s4 1966171168
        %v431 = vunpack.c.0.s8 %v430
        %v432 = vlaneseq
        %v433 = vshrl.u32 %v432, 7
        %v434 = vsub.s32 %v431, %v433
        %v435 = vrot.slane %v407, %v434
        %v436 = vcombine.low %v414, %v421
        %v437 = vcombine.low %v428, %v435
        %v439 = vunpack.c.l.s4 1966171168
        %v440 = vunpack.c.0.s8 %v439
        %v441 = vlaneseq
        %v442 = vshrl.u32 %v441, 7
        %v443 = vsub.s32 %v440, %v442
        %v444 = vrot.slane %v436, %v443
        %v446 = vunpack.c.l.s4 1966171168
        %v447 = vunpack.c.0.s8 %v446
        %v448 = vlaneseq
        %v449 = vshrl.u32 %v448, 7
        %v450 = vsub.s32 %v447, %v449
        %v451 = vrot.slane %v437, %v450
        %v452 = vcombine.low %v444, %v451
        %v453 = vcombine.low %v294, %v298
        %v454 = vcombine.low %v302, %v306
        %v455 = vcombine.low %v310, %v314
        %v456 = vcombine.low %v318, %v322
        %v458 = vunpack.c.l.s4 1966171168
        %v459 = vunpack.c.0.s8 %v458
        %v460 = vlaneseq
        %v461 = vshrl.u32 %v460, 7
        %v462 = vsub.s32 %v459, %v461
        %v463 = vrot.slane %v453, %v462
        %v465 = vunpack.c.l.s4 1966171168
        %v466 = vunpack.c.0.s8 %v465
        %v467 = vlaneseq
        %v468 = vshrl.u32 %v467, 7
        %v469 = vsub.s32 %v466, %v468
        %v470 = vrot.slane %v454, %v469
        %v472 = vunpack.c.l.s4 1966171168
        %v473 = vunpack.c.0.s8 %v472
        %v474 = vlaneseq
        %v475 = vshrl.u32 %v474, 7
        %v476 = vsub.s32 %v473, %v475
        %v477 = vrot.slane %v455, %v476
        %v479 = vunpack.c.l.s4 1966171168
        %v480 = vunpack.c.0.s8 %v479
        %v481 = vlaneseq
        %v482 = vshrl.u32 %v481, 7
        %v483 = vsub.s32 %v480, %v482
        %v484 = vrot.slane %v456, %v483
        %v485 = vcombine.low %v463, %v470
        %v486 = vcombine.low %v477, %v484
        %v488 = vunpack.c.l.s4 1966171168
        %v489 = vunpack.c.0.s8 %v488
        %v490 = vlaneseq
        %v491 = vshrl.u32 %v490, 7
        %v492 = vsub.s32 %v489, %v491
        %v493 = vrot.slane %v485, %v492
        %v495 = vunpack.c.l.s4 1966171168
        %v496 = vunpack.c.0.s8 %v495
        %v497 = vlaneseq
        %v498 = vshrl.u32 %v497, 7
        %v499 = vsub.s32 %v496, %v498
        %v500 = vrot.slane %v486, %v499
        %v501 = vcombine.low %v493, %v500
        %v502 = vcombine.low %v326, %v330
        %v503 = vcombine.low %v334, %v338
        %v504 = vcombine.low %v342, %v346
        %v505 = vcombine.low %v350, %v354
        %v507 = vunpack.c.l.s4 1966171168
        %v508 = vunpack.c.0.s8 %v507
        %v509 = vlaneseq
        %v510 = vshrl.u32 %v509, 7
        %v511 = vsub.s32 %v508, %v510
        %v512 = vrot.slane %v502, %v511
        %v514 = vunpack.c.l.s4 1966171168
        %v515 = vunpack.c.0.s8 %v514
        %v516 = vlaneseq
        %v517 = vshrl.u32 %v516, 7
        %v518 = vsub.s32 %v515, %v517
        %v519 = vrot.slane %v503, %v518
        %v521 = vunpack.c.l.s4 1966171168
        %v522 = vunpack.c.0.s8 %v521
        %v523 = vlaneseq
        %v524 = vshrl.u32 %v523, 7
        %v525 = vsub.s32 %v522, %v524
        %v526 = vrot.slane %v504, %v525
        %v528 = vunpack.c.l.s4 1966171168
        %v529 = vunpack.c.0.s8 %v528
        %v530 = vlaneseq
        %v531 = vshrl.u32 %v530, 7
        %v532 = vsub.s32 %v529, %v531
        %v533 = vrot.slane %v505, %v532
        %v534 = vcombine.low %v512, %v519
        %v535 = vcombine.low %v526, %v533
        %v537 = vunpack.c.l.s4 1966171168
        %v538 = vunpack.c.0.s8 %v537
        %v539 = vlaneseq
        %v540 = vshrl.u32 %v539, 7
        %v541 = vsub.s32 %v538, %v540
        %v542 = vrot.slane %v534, %v541
        %v544 = vunpack.c.l.s4 1966171168
        %v545 = vunpack.c.0.s8 %v544
        %v546 = vlaneseq
        %v547 = vshrl.u32 %v546, 7
        %v548 = vsub.s32 %v545, %v547
        %v549 = vrot.slane %v535, %v548
        %v550 = vcombine.low %v542, %v549
        %551 = vset.pattern.permute.xlu0 0
        %552 = vperm.xlu0 %551, %v403
        %v553 = vpop.permute.xlu0 %552
        %554 = vset.pattern.permute.xlu0 0
        %555 = vperm.xlu0 %554, %v452
        %v556 = vpop.permute.xlu0 %555
        %557 = vset.pattern.permute.xlu0 0
        %558 = vperm.xlu0 %557, %v501
        %v559 = vpop.permute.xlu0 %558
        %560 = vset.pattern.permute.xlu0 0
        %561 = vperm.xlu0 %560, %v550
        %v562 = vpop.permute.xlu0 %561
        %v563 = vlaneseq
        %v564 = vand.u32 %v563, 127
        %v565 = vlaneseq
        %v566 = vshrl.u32 %v565, 7
        %v567 = vsub.s32 %v564, %v566
        %v568 = vrot.slane %v553, %v567
        %v569 = vadd.s32 %v564, 4294967288
        %v570 = vlaneseq
        %v571 = vshrl.u32 %v570, 7
        %v572 = vsub.s32 %v569, %v571
        %v573 = vrot.slane %v556, %v572
        %vm574 = vcmask 130112
        %v575 = vsel %vm574, %v573, %v568
        %v576 = vadd.s32 %v564, 4294967280
        %v577 = vlaneseq
        %v578 = vshrl.u32 %v577, 7
        %v579 = vsub.s32 %v576, %v578
        %v580 = vrot.slane %v559, %v579
        %vm581 = vcmask 195712
        %v582 = vsel %vm581, %v580, %v575
        %v583 = vadd.s32 %v564, 4294967272
        %v584 = vlaneseq
        %v585 = vshrl.u32 %v584, 7
        %v586 = vsub.s32 %v583, %v585
        %v587 = vrot.slane %v562, %v586
        %vm588 = vcmask 261312
        %v589 = vsel %vm588, %v587, %v582
        %v591 = vunpack.c.l.s4 1966171168
        %v592 = vunpack.c.0.s8 %v591
        %v593 = vlaneseq
        %v594 = vshrl.u32 %v593, 7
        %v595 = vsub.s32 %v592, %v594
        %v596 = vrot.slane %v589, %v595
        %v598 = vunpack.c.l.s4 1966171168
        %v599 = vunpack.c.0.s8 %v598
        %v600 = vlaneseq
        %v601 = vshrl.u32 %v600, 7
        %v602 = vsub.s32 %v599, %v601
        %v603 = vrot.slane %v596, %v602
        %v605 = vadd.f32 %v214, %v603
        %vm606 = vcmask 253952
        %607 = vst.msk [vmem:[#allocation2] sm:$0x1] %vm606, %v605
        %v608 = vld [vmem:[#allocation3] sm:$0x1]
        %609 = vmax.xlane.f32.xlu0 %v210
        %v610 = vpop.xlane.xlu0 %609
        %611 = vmax.xlane.f32.xlu0 %v211
        %v612 = vpop.xlane.xlu0 %611
        %613 = vmax.xlane.f32.xlu0 %v212
        %v614 = vpop.xlane.xlu0 %613
        %615 = vmax.xlane.f32.xlu0 %v213
        %v616 = vpop.xlane.xlu0 %615
        %v621 = vlaneseq
        %v622 = vshrl.u32 %v621, 7
        %v623 = vsub.s32 0, %v622
        %v624 = vrot.slane %v610, %v623
        %v625 = vlaneseq
        %v626 = vshrl.u32 %v625, 7
        %v627 = vsub.s32 1, %v626
        %v628 = vrot.slane %v610, %v627
        %v629 = vlaneseq
        %v630 = vshrl.u32 %v629, 7
        %v631 = vsub.s32 2, %v630
        %v632 = vrot.slane %v610, %v631
        %v633 = vlaneseq
        %v634 = vshrl.u32 %v633, 7
        %v635 = vsub.s32 3, %v634
        %v636 = vrot.slane %v610, %v635
        %v637 = vlaneseq
        %v638 = vshrl.u32 %v637, 7
        %v639 = vsub.s32 4, %v638
        %v640 = vrot.slane %v610, %v639
        %v641 = vlaneseq
        %v642 = vshrl.u32 %v641, 7
        %v643 = vsub.s32 5, %v642
        %v644 = vrot.slane %v610, %v643
        %v645 = vlaneseq
        %v646 = vshrl.u32 %v645, 7
        %v647 = vsub.s32 6, %v646
        %v648 = vrot.slane %v610, %v647
        %v649 = vlaneseq
        %v650 = vshrl.u32 %v649, 7
        %v651 = vsub.s32 7, %v650
        %v652 = vrot.slane %v610, %v651
        %v653 = vlaneseq
        %v654 = vshrl.u32 %v653, 7
        %v655 = vsub.s32 0, %v654
        %v656 = vrot.slane %v612, %v655
        %v657 = vlaneseq
        %v658 = vshrl.u32 %v657, 7
        %v659 = vsub.s32 1, %v658
        %v660 = vrot.slane %v612, %v659
        %v661 = vlaneseq
        %v662 = vshrl.u32 %v661, 7
        %v663 = vsub.s32 2, %v662
        %v664 = vrot.slane %v612, %v663
        %v665 = vlaneseq
        %v666 = vshrl.u32 %v665, 7
        %v667 = vsub.s32 3, %v666
        %v668 = vrot.slane %v612, %v667
        %v669 = vlaneseq
        %v670 = vshrl.u32 %v669, 7
        %v671 = vsub.s32 4, %v670
        %v672 = vrot.slane %v612, %v671
        %v673 = vlaneseq
        %v674 = vshrl.u32 %v673, 7
        %v675 = vsub.s32 5, %v674
        %v676 = vrot.slane %v612, %v675
        %v677 = vlaneseq
        %v678 = vshrl.u32 %v677, 7
        %v679 = vsub.s32 6, %v678
        %v680 = vrot.slane %v612, %v679
        %v681 = vlaneseq
        %v682 = vshrl.u32 %v681, 7
        %v683 = vsub.s32 7, %v682
        %v684 = vrot.slane %v612, %v683
        %v685 = vlaneseq
        %v686 = vshrl.u32 %v685, 7
        %v687 = vsub.s32 0, %v686
        %v688 = vrot.slane %v614, %v687
        %v689 = vlaneseq
        %v690 = vshrl.u32 %v689, 7
        %v691 = vsub.s32 1, %v690
        %v692 = vrot.slane %v614, %v691
        %v693 = vlaneseq
        %v694 = vshrl.u32 %v693, 7
        %v695 = vsub.s32 2, %v694
        %v696 = vrot.slane %v614, %v695
        %v697 = vlaneseq
        %v698 = vshrl.u32 %v697, 7
        %v699 = vsub.s32 3, %v698
        %v700 = vrot.slane %v614, %v699
        %v701 = vlaneseq
        %v702 = vshrl.u32 %v701, 7
        %v703 = vsub.s32 4, %v702
        %v704 = vrot.slane %v614, %v703
        %v705 = vlaneseq
        %v706 = vshrl.u32 %v705, 7
        %v707 = vsub.s32 5, %v706
        %v708 = vrot.slane %v614, %v707
        %v709 = vlaneseq
        %v710 = vshrl.u32 %v709, 7
        %v711 = vsub.s32 6, %v710
        %v712 = vrot.slane %v614, %v711
        %v713 = vlaneseq
        %v714 = vshrl.u32 %v713, 7
        %v715 = vsub.s32 7, %v714
        %v716 = vrot.slane %v614, %v715
        %v717 = vlaneseq
        %v718 = vshrl.u32 %v717, 7
        %v719 = vsub.s32 0, %v718
        %v720 = vrot.slane %v616, %v719
        %v721 = vlaneseq
        %v722 = vshrl.u32 %v721, 7
        %v723 = vsub.s32 1, %v722
        %v724 = vrot.slane %v616, %v723
        %v725 = vlaneseq
        %v726 = vshrl.u32 %v725, 7
        %v727 = vsub.s32 2, %v726
        %v728 = vrot.slane %v616, %v727
        %v729 = vlaneseq
        %v730 = vshrl.u32 %v729, 7
        %v731 = vsub.s32 3, %v730
        %v732 = vrot.slane %v616, %v731
        %v733 = vlaneseq
        %v734 = vshrl.u32 %v733, 7
        %v735 = vsub.s32 4, %v734
        %v736 = vrot.slane %v616, %v735
        %v737 = vlaneseq
        %v738 = vshrl.u32 %v737, 7
        %v739 = vsub.s32 5, %v738
        %v740 = vrot.slane %v616, %v739
        %v741 = vlaneseq
        %v742 = vshrl.u32 %v741, 7
        %v743 = vsub.s32 6, %v742
        %v744 = vrot.slane %v616, %v743
        %v745 = vlaneseq
        %v746 = vshrl.u32 %v745, 7
        %v747 = vsub.s32 7, %v746
        %v748 = vrot.slane %v616, %v747
        %v749 = vcombine.low %v624, %v628
        %v750 = vcombine.low %v632, %v636
        %v751 = vcombine.low %v640, %v644
        %v752 = vcombine.low %v648, %v652
        %v754 = vunpack.c.l.s4 1966171168
        %v755 = vunpack.c.0.s8 %v754
        %v756 = vlaneseq
        %v757 = vshrl.u32 %v756, 7
        %v758 = vsub.s32 %v755, %v757
        %v759 = vrot.slane %v749, %v758
        %v761 = vunpack.c.l.s4 1966171168
        %v762 = vunpack.c.0.s8 %v761
        %v763 = vlaneseq
        %v764 = vshrl.u32 %v763, 7
        %v765 = vsub.s32 %v762, %v764
        %v766 = vrot.slane %v750, %v765
        %v768 = vunpack.c.l.s4 1966171168
        %v769 = vunpack.c.0.s8 %v768
        %v770 = vlaneseq
        %v771 = vshrl.u32 %v770, 7
        %v772 = vsub.s32 %v769, %v771
        %v773 = vrot.slane %v751, %v772
        %v775 = vunpack.c.l.s4 1966171168
        %v776 = vunpack.c.0.s8 %v775
        %v777 = vlaneseq
        %v778 = vshrl.u32 %v777, 7
        %v779 = vsub.s32 %v776, %v778
        %v780 = vrot.slane %v752, %v779
        %v781 = vcombine.low %v759, %v766
        %v782 = vcombine.low %v773, %v780
        %v784 = vunpack.c.l.s4 1966171168
        %v785 = vunpack.c.0.s8 %v784
        %v786 = vlaneseq
        %v787 = vshrl.u32 %v786, 7
        %v788 = vsub.s32 %v785, %v787
        %v789 = vrot.slane %v781, %v788
        %v791 = vunpack.c.l.s4 1966171168
        %v792 = vunpack.c.0.s8 %v791
        %v793 = vlaneseq
        %v794 = vshrl.u32 %v793, 7
        %v795 = vsub.s32 %v792, %v794
        %v796 = vrot.slane %v782, %v795
        %v797 = vcombine.low %v789, %v796
        %v798 = vcombine.low %v656, %v660
        %v799 = vcombine.low %v664, %v668
        %v800 = vcombine.low %v672, %v676
        %v801 = vcombine.low %v680, %v684
        %v803 = vunpack.c.l.s4 1966171168
        %v804 = vunpack.c.0.s8 %v803
        %v805 = vlaneseq
        %v806 = vshrl.u32 %v805, 7
        %v807 = vsub.s32 %v804, %v806
        %v808 = vrot.slane %v798, %v807
        %v810 = vunpack.c.l.s4 1966171168
        %v811 = vunpack.c.0.s8 %v810
        %v812 = vlaneseq
        %v813 = vshrl.u32 %v812, 7
        %v814 = vsub.s32 %v811, %v813
        %v815 = vrot.slane %v799, %v814
        %v817 = vunpack.c.l.s4 1966171168
        %v818 = vunpack.c.0.s8 %v817
        %v819 = vlaneseq
        %v820 = vshrl.u32 %v819, 7
        %v821 = vsub.s32 %v818, %v820
        %v822 = vrot.slane %v800, %v821
        %v824 = vunpack.c.l.s4 1966171168
        %v825 = vunpack.c.0.s8 %v824
        %v826 = vlaneseq
        %v827 = vshrl.u32 %v826, 7
        %v828 = vsub.s32 %v825, %v827
        %v829 = vrot.slane %v801, %v828
        %v830 = vcombine.low %v808, %v815
        %v831 = vcombine.low %v822, %v829
        %v833 = vunpack.c.l.s4 1966171168
        %v834 = vunpack.c.0.s8 %v833
        %v835 = vlaneseq
        %v836 = vshrl.u32 %v835, 7
        %v837 = vsub.s32 %v834, %v836
        %v838 = vrot.slane %v830, %v837
        %v840 = vunpack.c.l.s4 1966171168
        %v841 = vunpack.c.0.s8 %v840
        %v842 = vlaneseq
        %v843 = vshrl.u32 %v842, 7
        %v844 = vsub.s32 %v841, %v843
        %v845 = vrot.slane %v831, %v844
        %v846 = vcombine.low %v838, %v845
        %v847 = vcombine.low %v688, %v692
        %v848 = vcombine.low %v696, %v700
        %v849 = vcombine.low %v704, %v708
        %v850 = vcombine.low %v712, %v716
        %v852 = vunpack.c.l.s4 1966171168
        %v853 = vunpack.c.0.s8 %v852
        %v854 = vlaneseq
        %v855 = vshrl.u32 %v854, 7
        %v856 = vsub.s32 %v853, %v855
        %v857 = vrot.slane %v847, %v856
        %v859 = vunpack.c.l.s4 1966171168
        %v860 = vunpack.c.0.s8 %v859
        %v861 = vlaneseq
        %v862 = vshrl.u32 %v861, 7
        %v863 = vsub.s32 %v860, %v862
        %v864 = vrot.slane %v848, %v863
        %v866 = vunpack.c.l.s4 1966171168
        %v867 = vunpack.c.0.s8 %v866
        %v868 = vlaneseq
        %v869 = vshrl.u32 %v868, 7
        %v870 = vsub.s32 %v867, %v869
        %v871 = vrot.slane %v849, %v870
        %v873 = vunpack.c.l.s4 1966171168
        %v874 = vunpack.c.0.s8 %v873
        %v875 = vlaneseq
        %v876 = vshrl.u32 %v875, 7
        %v877 = vsub.s32 %v874, %v876
        %v878 = vrot.slane %v850, %v877
        %v879 = vcombine.low %v857, %v864
        %v880 = vcombine.low %v871, %v878
        %v882 = vunpack.c.l.s4 1966171168
        %v883 = vunpack.c.0.s8 %v882
        %v884 = vlaneseq
        %v885 = vshrl.u32 %v884, 7
        %v886 = vsub.s32 %v883, %v885
        %v887 = vrot.slane %v879, %v886
        %v889 = vunpack.c.l.s4 1966171168
        %v890 = vunpack.c.0.s8 %v889
        %v891 = vlaneseq
        %v892 = vshrl.u32 %v891, 7
        %v893 = vsub.s32 %v890, %v892
        %v894 = vrot.slane %v880, %v893
        %v895 = vcombine.low %v887, %v894
        %v896 = vcombine.low %v720, %v724
        %v897 = vcombine.low %v728, %v732
        %v898 = vcombine.low %v736, %v740
        %v899 = vcombine.low %v744, %v748
        %v901 = vunpack.c.l.s4 1966171168
        %v902 = vunpack.c.0.s8 %v901
        %v903 = vlaneseq
        %v904 = vshrl.u32 %v903, 7
        %v905 = vsub.s32 %v902, %v904
        %v906 = vrot.slane %v896, %v905
        %v908 = vunpack.c.l.s4 1966171168
        %v909 = vunpack.c.0.s8 %v908
        %v910 = vlaneseq
        %v911 = vshrl.u32 %v910, 7
        %v912 = vsub.s32 %v909, %v911
        %v913 = vrot.slane %v897, %v912
        %v915 = vunpack.c.l.s4 1966171168
        %v916 = vunpack.c.0.s8 %v915
        %v917 = vlaneseq
        %v918 = vshrl.u32 %v917, 7
        %v919 = vsub.s32 %v916, %v918
        %v920 = vrot.slane %v898, %v919
        %v922 = vunpack.c.l.s4 1966171168
        %v923 = vunpack.c.0.s8 %v922
        %v924 = vlaneseq
        %v925 = vshrl.u32 %v924, 7
        %v926 = vsub.s32 %v923, %v925
        %v927 = vrot.slane %v899, %v926
        %v928 = vcombine.low %v906, %v913
        %v929 = vcombine.low %v920, %v927
        %v931 = vunpack.c.l.s4 1966171168
        %v932 = vunpack.c.0.s8 %v931
        %v933 = vlaneseq
        %v934 = vshrl.u32 %v933, 7
        %v935 = vsub.s32 %v932, %v934
        %v936 = vrot.slane %v928, %v935
        %v938 = vunpack.c.l.s4 1966171168
        %v939 = vunpack.c.0.s8 %v938
        %v940 = vlaneseq
        %v941 = vshrl.u32 %v940, 7
        %v942 = vsub.s32 %v939, %v941
        %v943 = vrot.slane %v929, %v942
        %v944 = vcombine.low %v936, %v943
        %945 = vset.pattern.permute.xlu0 0
        %946 = vperm.xlu0 %945, %v797
        %v947 = vpop.permute.xlu0 %946
        %948 = vset.pattern.permute.xlu0 0
        %949 = vperm.xlu0 %948, %v846
        %v950 = vpop.permute.xlu0 %949
        %951 = vset.pattern.permute.xlu0 0
        %952 = vperm.xlu0 %951, %v895
        %v953 = vpop.permute.xlu0 %952
        %954 = vset.pattern.permute.xlu0 0
        %955 = vperm.xlu0 %954, %v944
        %v956 = vpop.permute.xlu0 %955
        %v957 = vlaneseq
        %v958 = vshrl.u32 %v957, 7
        %v959 = vsub.s32 %v564, %v958
        %v960 = vrot.slane %v947, %v959
        %v961 = vlaneseq
        %v962 = vshrl.u32 %v961, 7
        %v963 = vsub.s32 %v569, %v962
        %v964 = vrot.slane %v950, %v963
        %v965 = vsel %vm574, %v964, %v960
        %v966 = vlaneseq
        %v967 = vshrl.u32 %v966, 7
        %v968 = vsub.s32 %v576, %v967
        %v969 = vrot.slane %v953, %v968
        %v970 = vsel %vm581, %v969, %v965
        %v971 = vlaneseq
        %v972 = vshrl.u32 %v971, 7
        %v973 = vsub.s32 %v583, %v972
        %v974 = vrot.slane %v956, %v973
        %v975 = vsel %vm588, %v974, %v970
        %v977 = vunpack.c.l.s4 1966171168
        %v978 = vunpack.c.0.s8 %v977
        %v979 = vlaneseq
        %v980 = vshrl.u32 %v979, 7
        %v981 = vsub.s32 %v978, %v980
        %v982 = vrot.slane %v975, %v981
        %v984 = vunpack.c.l.s4 1966171168
        %v985 = vunpack.c.0.s8 %v984
        %v986 = vlaneseq
        %v987 = vshrl.u32 %v986, 7
        %v988 = vsub.s32 %v985, %v987
        %v989 = vrot.slane %v982, %v988
        %v991 = vmax.f32 %v608, %v989
        %992 = vst.msk [vmem:[#allocation3] sm:$0x1] %vm606, %v991
        %p993 = scmp.eq.s32.totalorder %s25, 1
        // Predicated region
        $region41: #{tpu_custom_call.1} parent=31 // pred_check
          %p994 = pneg %p993
        $region42: #{tpu_custom_call.1} parent=31 // pred_check_branch
          %996 = sbr.rel (%p994) target = $region44
        $region43: #{tpu_custom_call.1} parent=31 // pred_region
          %v997 = vld [vmem:[#allocation2] sm:$0x1]
          %v998 = vmul.f32 %v997, 0.00390625
          %v999 = vld [vmem:[#allocation3] sm:$0x1]
          %v1000 = vld [vmem:[%s1] sm:$0xff]
          %v1001 = vld [vmem:[%s2] sm:$0xff]
          %v1002 = vld [vmem:[%s2 + $0x8] sm:$0xff]
          %v1003 = vld [vmem:[%s2 + $0x10] sm:$0xff]
          %v1004 = vld [vmem:[%s2 + $0x18] sm:$0xff]
          %v1006 = vlaneseq
          %v1007 = vshrl.u32 %v1006, 7
          %v1008 = vsub.s32 0, %v1007
          %v1009 = vrot.slane %v999, %v1008
          %vm1011 = vcmask 1040384
          %v1012 = vsel %vm1011, %v998, %v1009
          %vm1013 = vcmask 261120
          %v1015 = vsel %vm1013, %v1012, 0
          %v1018 = vsel %vm1013, %v1000, 0
          %1020 = vmatprep.subr.mxu0 0.0
          %1021 = vmatpush1.xpose.msra.mxu0 %v1018
          %1022 = vmatprep.subr.mxu0 0.0
          %1023 = vmatpush1.xpose.msra.mxu0 0.0
          %1024 = vmatprep.subr.mxu0 0.0
          %1025 = vmatpush1.xpose.msra.mxu0 0.0
          %1026 = vmatprep.subr.mxu0 0.0
          %1027 = vmatpush1.xpose.msra.mxu0 0.0
          %1028 = vmatprep.subr.mxu0 0.0
          %1029 = vmatpush1.xpose.msra.mxu0 0.0
          %1030 = vmatprep.subr.mxu0 0.0
          %1031 = vmatpush1.xpose.msra.mxu0 0.0
          %1032 = vmatprep.subr.mxu0 0.0
          %1033 = vmatpush1.xpose.msra.mxu0 0.0
          %1034 = vmatprep.subr.mxu0 0.0
          %1035 = vmatpush1.xpose.msra.mxu0 0.0
          %1036 = vmatprep.subr.mxu0 0.0
          %1037 = vmatpush1.xpose.msra.mxu0 0.0
          %1038 = vmatprep.subr.mxu0 0.0
          %1039 = vmatpush1.xpose.msra.mxu0 0.0
          %1040 = vmatprep.subr.mxu0 0.0
          %1041 = vmatpush1.xpose.msra.mxu0 0.0
          %1042 = vmatprep.subr.mxu0 0.0
          %1043 = vmatpush1.xpose.msra.mxu0 0.0
          %1044 = vmatprep.subr.mxu0 0.0
          %1045 = vmatpush1.xpose.msra.mxu0 0.0
          %1046 = vmatprep.subr.mxu0 0.0
          %1047 = vmatpush1.xpose.msra.mxu0 0.0
          %1048 = vmatprep.subr.mxu0 0.0
          %1049 = vmatpush1.xpose.msra.mxu0 0.0
          %1050 = vmatprep.subr.mxu0 0.0
          %1051 = vmatpush1.xpose.msra.mxu0 0.0
          %1052 = vmatprep.subr.mxu0 0.0
          %1053 = vmatpush1.xpose.msra.mxu0 0.0
          %1054 = vmatprep.subr.mxu0 0.0
          %1055 = vmatpush1.xpose.msra.mxu0 0.0
          %1056 = vmatprep.subr.mxu0 0.0
          %1057 = vmatpush1.xpose.msra.mxu0 0.0
          %1058 = vmatprep.subr.mxu0 0.0
          %1059 = vmatpush1.xpose.msra.mxu0 0.0
          %1060 = vmatprep.subr.mxu0 0.0
          %1061 = vmatpush1.xpose.msra.mxu0 0.0
          %1062 = vmatprep.subr.mxu0 0.0
          %1063 = vmatpush1.xpose.msra.mxu0 0.0
          %1064 = vmatprep.subr.mxu0 0.0
          %1065 = vmatpush1.xpose.msra.mxu0 0.0
          %1066 = vmatprep.subr.mxu0 0.0
          %1067 = vmatpush1.xpose.msra.mxu0 0.0
          %1068 = vmatprep.subr.mxu0 0.0
          %1069 = vmatpush1.xpose.msra.mxu0 0.0
          %1070 = vmatprep.subr.mxu0 0.0
          %1071 = vmatpush1.xpose.msra.mxu0 0.0
          %1072 = vmatprep.subr.mxu0 0.0
          %1073 = vmatpush1.xpose.msra.mxu0 0.0
          %1074 = vmatprep.subr.mxu0 0.0
          %1075 = vmatpush1.xpose.msra.mxu0 0.0
          %1076 = vmatprep.subr.mxu0 0.0
          %1077 = vmatpush1.xpose.msra.mxu0 0.0
          %1078 = vmatprep.subr.mxu0 0.0
          %1079 = vmatpush1.xpose.msra.mxu0 0.0
          %1080 = vmatprep.subr.mxu0 0.0
          %1081 = vmatpush1.xpose.msra.mxu0 0.0
          %1082 = vmatprep.subr.mxu0 0.0
          %1083 = vmatpush1.xpose.msra.mxu0 0.0
          %1084 = vmatprep.mubr.f32.mxu0 0.0
          %1085 = vmatmul.mubr.f32.gmra.mrb[0].mxu0 %v1015
          %v1086 = vpop.f32.mrb[0].mxu0
          %v1087 = vadd.f32 0.0, %v1086
          %v1088 = vpop.f32.mrb[0].mxu0
          %1089 = vdwg.mxu0
          %v1090 = vmax.f32 %v1087, 0.0
          %vm1091 = vcmask 58368
          %v1092 = vsel %vm1091, %v1090, 0.0
          %v1093 = vrot.slane %v1092, 4
          %v1094 = vadd.f32 %v1092, %v1093
          %v1095 = vrot.slane %v1094, 2
          %v1096 = vadd.f32 %v1094, %v1095
          %v1097 = vrot.slane %v1096, 1
          %v1098 = vadd.f32 %v1096, %v1097
          %vm1099 = vcmask 64512
          %v1101 = vsel %vm1099, %v1098, 0
          %v1104 = vsel %vm1099, %v1001, 0
          %v1107 = vsel %vm1099, %v1002, 0
          %v1110 = vsel %vm1099, %v1003, 0
          %v1113 = vsel %vm1099, %v1004, 0
          %1115 = vmatprep.subr.mxu0 0.0
          %1116 = vmatpush1.xpose.msra.mxu0 %v1104
          %1117 = vmatprep.subr.mxu0 0.0
          %1118 = vmatpush1.xpose.msra.mxu0 %v1107
          %1119 = vmatprep.subr.mxu0 0.0
          %1120 = vmatpush1.xpose.msra.mxu0 %v1110
          %1121 = vmatprep.subr.mxu0 0.0
          %1122 = vmatpush1.xpose.msra.mxu0 %v1113
          %1123 = vmatprep.subr.mxu0 0.0
          %1124 = vmatpush1.xpose.msra.mxu0 0.0
          %1125 = vmatprep.subr.mxu0 0.0
          %1126 = vmatpush1.xpose.msra.mxu0 0.0
          %1127 = vmatprep.subr.mxu0 0.0
          %1128 = vmatpush1.xpose.msra.mxu0 0.0
          %1129 = vmatprep.subr.mxu0 0.0
          %1130 = vmatpush1.xpose.msra.mxu0 0.0
          %1131 = vmatprep.subr.mxu0 0.0
          %1132 = vmatpush1.xpose.msra.mxu0 0.0
          %1133 = vmatprep.subr.mxu0 0.0
          %1134 = vmatpush1.xpose.msra.mxu0 0.0
          %1135 = vmatprep.subr.mxu0 0.0
          %1136 = vmatpush1.xpose.msra.mxu0 0.0
          %1137 = vmatprep.subr.mxu0 0.0
          %1138 = vmatpush1.xpose.msra.mxu0 0.0
          %1139 = vmatprep.subr.mxu0 0.0
          %1140 = vmatpush1.xpose.msra.mxu0 0.0
          %1141 = vmatprep.subr.mxu0 0.0
          %1142 = vmatpush1.xpose.msra.mxu0 0.0
          %1143 = vmatprep.subr.mxu0 0.0
          %1144 = vmatpush1.xpose.msra.mxu0 0.0
          %1145 = vmatprep.subr.mxu0 0.0
          %1146 = vmatpush1.xpose.msra.mxu0 0.0
          %1147 = vmatprep.subr.mxu0 0.0
          %1148 = vmatpush1.xpose.msra.mxu0 0.0
          %1149 = vmatprep.subr.mxu0 0.0
          %1150 = vmatpush1.xpose.msra.mxu0 0.0
          %1151 = vmatprep.subr.mxu0 0.0
          %1152 = vmatpush1.xpose.msra.mxu0 0.0
          %1153 = vmatprep.subr.mxu0 0.0
          %1154 = vmatpush1.xpose.msra.mxu0 0.0
          %1155 = vmatprep.subr.mxu0 0.0
          %1156 = vmatpush1.xpose.msra.mxu0 0.0
          %1157 = vmatprep.subr.mxu0 0.0
          %1158 = vmatpush1.xpose.msra.mxu0 0.0
          %1159 = vmatprep.subr.mxu0 0.0
          %1160 = vmatpush1.xpose.msra.mxu0 0.0
          %1161 = vmatprep.subr.mxu0 0.0
          %1162 = vmatpush1.xpose.msra.mxu0 0.0
          %1163 = vmatprep.subr.mxu0 0.0
          %1164 = vmatpush1.xpose.msra.mxu0 0.0
          %1165 = vmatprep.subr.mxu0 0.0
          %1166 = vmatpush1.xpose.msra.mxu0 0.0
          %1167 = vmatprep.subr.mxu0 0.0
          %1168 = vmatpush1.xpose.msra.mxu0 0.0
          %1169 = vmatprep.subr.mxu0 0.0
          %1170 = vmatpush1.xpose.msra.mxu0 0.0
          %1171 = vmatprep.subr.mxu0 0.0
          %1172 = vmatpush1.xpose.msra.mxu0 0.0
          %1173 = vmatprep.subr.mxu0 0.0
          %1174 = vmatpush1.xpose.msra.mxu0 0.0
          %1175 = vmatprep.subr.mxu0 0.0
          %1176 = vmatpush1.xpose.msra.mxu0 0.0
          %1177 = vmatprep.subr.mxu0 0.0
          %1178 = vmatpush1.xpose.msra.mxu0 0.0
          %1179 = vmatprep.mubr.f32.mxu0 0.0
          %1180 = vmatmul.mubr.f32.gmra.mrb[0].mxu0 %v1101
          %v1181 = vpop.f32.mrb[0].mxu0
          %v1182 = vadd.f32 0.0, %v1181
          %v1183 = vpop.f32.mrb[0].mxu0
          %1184 = vdwg.mxu0
          %v1185 = vxor.u32 %v1182, 2147483648
          %v1186 = vmul.f32 %v1185, 1.442695
          %v1187 = vpow.pop %v1186
          %v1188 = vadd.f32 %v1187, 1.0
          %v1189 = vrcp.pop %v1188
          %v1190 = vmul.f32 1.0, %v1189
          %1191 = vst.msk [vmem:[%s202] sm:$0x1] %vm606, %v1190
        $region44: #{tpu_custom_call.1} parent=31 // pred_fallthru
          _
        %s1192 = sand.u32 %s110, 1
        %s1193 = scalar_lea.sflag [#allocation6], %s1192
        %s1194 = sand.u32 %s110, 1
        %s1195 = scalar_lea.vmem [#allocation7], %s1194
        // Predicated region
        $region45: #{tpu_custom_call.1} parent=31 // pred_check
          %p1196 = pneg %p120
        $region46: #{tpu_custom_call.1} parent=31 // pred_check_branch
          %1198 = sbr.rel (%p1196) target = $region48
        $region47: #{tpu_custom_call.1} parent=31 // pred_region
          %s1200 = ssub.s32 16, 16
          %1201 = vsyncadd %s1193, %s1200
          %s1202 = smul.addr %s24, 16
          %s1203 = scalar_lea.hbm %s3, %s1202
          %s1205 = sshll.u32 %s1195, 4
          %s1206 = int_to_ptr.vmem [resolvable:$true] %s1205
          %1208 = dma.vmem_to_hbm [thread:$0]  %s1206, 16, %s1203, %s1193
        $region48: #{tpu_custom_call.1} parent=31 // pred_fallthru
          _
      $region32: #{tpu_custom_call.1} parent=5 // pred_fallthru
        _
      %p1209 = scmp.le.s32.totalorder 2, %s15
      // Predicated region
      $region49: #{tpu_custom_call.1} parent=5 // pred_check
        %p1210 = pneg %p1209
      $region50: #{tpu_custom_call.1} parent=5 // pred_check_branch
        %1212 = sbr.rel (%p1210) target = $region52
      $region51: #{tpu_custom_call.1} parent=5 // pred_region
        %s1213 = ssub.s32 %s15, 2
        // Predicated region
        $region53: #{tpu_custom_call.1} parent=51 // pred_check
          %p1214 = pneg %p126
        $region54: #{tpu_custom_call.1} parent=51 // pred_check_branch
          %1216 = sbr.rel (%p1214) target = $region56
        $region55: #{tpu_custom_call.1} parent=51 // pred_region
          %s1217 = sand.u32 %s111, 1
          %s1218 = scalar_lea.sflag [#allocation6], %s1217
          %s1219 = sand.u32 %s111, 1
          %s1220 = scalar_lea.vmem [#allocation7], %s1219
          %1221 = dma.done %s1218, 16
        $region56: #{tpu_custom_call.1} parent=51 // pred_fallthru
          _
      $region52: #{tpu_custom_call.1} parent=5 // pred_fallthru
        _
    $region6: #{tpu_custom_call.1} parent=1 // loop_footer
      %s19 = sadd.s32 1, %s15
    $region7: #{tpu_custom_call.1} parent=1 // loop_footer_branch
      %14 = sbr.rel target = $region3
    $region8: #{tpu_custom_call.1} parent=1 // loop_exit
      _
    %1222 = vsyncpa [#allocation5], 1
    %s1223 = scalar_lea.sflag [#allocation5], 1
    %1224 = vsyncpa %s1223, 1
    %1225 = vsyncpa [#allocation6], 1
    %s1226 = scalar_lea.sflag [#allocation6], 1
    %1227 = vsyncpa %s1226, 1

</llo_original>
